<compile_context>
chip_gen: v7x
topology: tpu7x:2x2x1
jax: 0.10.0
libtpu: 0.0.40
codegen_flags: <defaults>
</compile_context>

<pallas_src>
import functools

import jax
import jax.numpy as jnp
from jax.experimental import pallas as pl
from jax.experimental.pallas import tpu as pltpu

_LANE = 128


def _cdiv(a, b):
    return (a + b - 1) // b


def _round_up(a, b):
    return _cdiv(a, b) * b


def _tpu_generation():
    """Best-effort TPU generation from device_kind; 0 if unknown."""
    try:
        kind = jax.devices()[0].device_kind.lower()
    except Exception:
        return 0
    for g in (7, 6, 5, 4):
        if f"v{g}" in kind:
            return g
    return 0


def _attn_pool_kernel(x_ref, w1_ref, b1_ref, w2_ref, b2_ref, o_ref, acc_ref, *,
                      n_valid, tile_n, tiles_per_split, hidden, d_out, d_pad,
                      fuse_l2):
    split = pl.program_id(0)          # parallel axis (v7x megacore split)
    step = pl.program_id(1)           # reduction over node tiles

    @pl.when(step == 0)
    def _init():
        acc_ref[...] = jnp.zeros_like(acc_ref)

    x = x_ref[...]                                            # (tile_n, D_in)

    # Layer 1 (gate|feat fused along the output axis): one MXU pass over x.
    h = jnp.dot(x, w1_ref[...], preferred_element_type=jnp.float32)
    h = jnp.maximum(h + b1_ref[...], 0.0)                     # f32 bias + ReLU

    if fuse_l2:
        # Block-diagonal fused layer 2.  Gate occupies lanes [0, d_pad) and
        # feat lanes [d_pad, 2*d_pad), so both slices start on a lane tile.
        gf = jnp.dot(h.astype(w2_ref.dtype), w2_ref[...],
                     preferred_element_type=jnp.float32) + b2_ref[...]
        gate = gf[:, :d_out]
        feat = gf[:, d_pad:d_pad + d_out]
    else:
        # 2H > MXU width: two matmuls on the already-resident hidden
        # activations instead of a 2x-FLOP block-diagonal matmul.
        hh = h.astype(w2_ref.dtype)
        gate = jnp.dot(hh[:, :hidden], w2_ref[0],
                       preferred_element_type=jnp.float32) + b2_ref[0]
        feat = jnp.dot(hh[:, hidden:], w2_ref[1],
                       preferred_element_type=jnp.float32) + b2_ref[1]

    def _accumulate(g, f):
        # softmax over the feature axis (F.softmax(gate, -1)), then the
        # gate-weighted node sum for this tile.
        m = jnp.max(g, axis=-1, keepdims=True)
        e = jnp.exp(g - m)            # f32 exp (v5e-safe; bf16 possible on v6e+)
        denom = jnp.sum(e, axis=-1, keepdims=True)
        contrib = f * (e * pl.reciprocal(denom, approx=True))
        acc_ref[...] += jnp.sum(contrib, axis=0, keepdims=True)

    row_base = (split * tiles_per_split + step) * tile_n
    tile_is_full = row_base + tile_n <= n_valid

    @pl.when(tile_is_full)
    def _interior():                  # interior tiles: no masking work at all
        _accumulate(gate, feat)

    @pl.when(jnp.logical_not(tile_is_full))
    def _boundary():                  # ragged tail / phantom tiles only
        rows = row_base + jax.lax.broadcasted_iota(jnp.int32, (tile_n, d_out), 0)
        valid = rows < n_valid
        # SELECT (not multiply) before exp: undefined tail rows must not be
        # able to produce inf/NaN that would survive a multiplicative mask.
        _accumulate(jnp.where(valid, gate, -1e30), jnp.where(valid, feat, 0.0))

    @pl.when(step == pl.num_programs(1) - 1)
    def _finalize():
        o_ref[0] = acc_ref[...]


def _auto_tile_n(n, d_in, two_h, l2_cols, d_out, mm_bytes, budget_bytes):
    # Per-row VMEM working-set estimate (lane-padded layouts): double-buffered
    # x tile + f32 hidden acts + f32 layer-2 output + softmax temporaries.
    per_row = (2 * _round_up(d_in, _LANE) * mm_bytes
               + 4 * _round_up(two_h, _LANE)
               + 4 * _round_up(l2_cols, _LANE)
               + 4 * 4 * _round_up(d_out, _LANE))
    t = budget_bytes // per_row
    t = min(t, 32768)                      # sanity cap on a single tile
    t = min(t, _round_up(n, 8))            # never larger than (rounded) N
    return int(max(8, (t // 8) * 8))


def attention_pooling(x, params, *, tile_n=None, num_splits=None,
                      matmul_dtype=jnp.bfloat16):
    """AttentionPooling forward.  x: (N, D_in) f32.  Returns (D_out,) f32."""
    n, d_in = x.shape
    hidden = params["gw1"].shape[1]
    d_out = params["gw2"].shape[1]
    assert params["fw2"].shape[1] == d_out

    gen = _tpu_generation()
    if num_splits is None:
        # v7x has 2 TensorCores; on 1-TC chips (v5e/v6e) a split is overhead.
        num_splits = 2 if gen >= 7 else 1
    if gen in (4, 5, 6):                      # 128 MiB physical VMEM
        vmem_limit = 100 * 1024 * 1024
        work_budget = 32 * 1024 * 1024
    else:                                     # v7x (64 MiB) / unknown: conservative
        vmem_limit = 56 * 1024 * 1024
        work_budget = 16 * 1024 * 1024

    # ---- One-time weight prep (tiny; precompute once in a real pipeline). ----
    w1 = jnp.concatenate([params["gw1"], params["fw1"]], axis=1)   # (D_in, 2H)
    b1 = jnp.concatenate([params["gb1"], params["fb1"]], axis=1)   # (1, 2H) f32

    # Layer 2: fuse block-diagonally only while 2H fits one MXU pass.
    fuse_l2 = (2 * hidden) <= 128
    d_pad = _round_up(d_out, _LANE)
    if fuse_l2:
        w2 = jnp.zeros((2 * hidden, 2 * d_pad), jnp.float32)
        w2 = w2.at[:hidden, :d_out].set(params["gw2"])
        w2 = w2.at[hidden:, d_pad:d_pad + d_out].set(params["fw2"])
        b2 = jnp.zeros((1, 2 * d_pad), jnp.float32)
        b2 = b2.at[:, :d_out].set(params["gb2"])
        b2 = b2.at[:, d_pad:d_pad + d_out].set(params["fb2"])
        l2_cols = 2 * d_pad
    else:
        w2 = jnp.stack([params["gw2"], params["fw2"]])             # (2, H, D_out)
        b2 = jnp.stack([params["gb2"], params["fb2"]])             # (2, 1, D_out)
        l2_cols = 2 * d_out

    # bf16 matmul operands by default: x is the dominant HBM stream (if the
    # producer already emits bf16 this astype is a no-op).  Biases stay f32.
    mm_bytes = jnp.dtype(matmul_dtype).itemsize
    x_mm = x.astype(matmul_dtype)
    w1 = w1.astype(matmul_dtype)
    w2 = w2.astype(matmul_dtype)

    # ---- Node-axis tiling: size tiles by VMEM bytes, not row count. ----
    if tile_n is None:
        tile_n = _auto_tile_n(n, d_in, 2 * hidden, l2_cols, d_out, mm_bytes,
                              work_budget)
    else:
        tile_n = int(max(8, (int(tile_n) // 8) * 8))
        tile_n = min(tile_n, _round_up(n, 8))

    num_tiles = _cdiv(n, tile_n)
    num_splits = max(1, min(num_splits, num_tiles))
    tiles_per_split = _cdiv(num_tiles, num_splits)
    last_tile = num_tiles - 1   # clamp keeps phantom-tile DMAs in bounds

    kernel = functools.partial(
        _attn_pool_kernel, n_valid=n, tile_n=tile_n,
        tiles_per_split=tiles_per_split, hidden=hidden, d_out=d_out,
        d_pad=d_pad, fuse_l2=fuse_l2)

    # Whole-array, single-buffered VMEM residents (no pipeline double-buffer).
    resident = lambda: pl.BlockSpec(memory_space=pltpu.MemorySpace.VMEM)

    out = pl.pallas_call(
        kernel,
        out_shape=jax.ShapeDtypeStruct((num_splits, 1, d_out), jnp.float32),
        grid_spec=pltpu.PrefetchScalarGridSpec(
            num_scalar_prefetch=0,
            grid=(num_splits, tiles_per_split),
            in_specs=[
                pl.BlockSpec(
                    (tile_n, d_in),
                    lambda c, i: (jnp.minimum(c * tiles_per_split + i,
                                              last_tile), 0)),
                resident(), resident(), resident(), resident(),
            ],
            out_specs=pl.BlockSpec((1, 1, d_out), lambda c, i: (c, 0, 0)),
            scratch_shapes=[pltpu.VMEM((1, d_out), jnp.float32)],
        ),
        # TODO(synk): on v7x, switch the split axis to pltpu.CORE_PARALLEL if
        # profiling shows "parallel" does not shard across its two TensorCores.
        compiler_params=pltpu.CompilerParams(
            dimension_semantics=("parallel", "arbitrary"),
            vmem_limit_bytes=vmem_limit,
        ),
    )(x_mm, w1, b1, w2, b2)

    # Sum per-split partials (trivial when num_splits == 1).
    return out.reshape(num_splits, d_out).sum(axis=0)


def _reference(x, p):
    gh = jnp.maximum(x @ p["gw1"] + p["gb1"], 0.0)
    gate = gh @ p["gw2"] + p["gb2"]
    fh = jnp.maximum(x @ p["fw1"] + p["fb1"], 0.0)
    feat = fh @ p["fw2"] + p["fb2"]
    gate = jax.nn.softmax(gate, axis=-1)
    return (feat * gate).sum(axis=0)


def make_params(key, d_in, hidden, d_out):
    ks = jax.random.split(key, 8)
    scale1 = 1.0 / jnp.sqrt(d_in)
    scale2 = 1.0 / jnp.sqrt(hidden)
    # Weights stored already transposed to (in, out); biases as (1, out) rows.
    return {
        "gw1": jax.random.uniform(ks[0], (d_in, hidden), jnp.float32, -scale1, scale1),
        "gb1": jax.random.uniform(ks[1], (1, hidden), jnp.float32, -scale1, scale1),
        "gw2": jax.random.uniform(ks[2], (hidden, d_out), jnp.float32, -scale2, scale2),
        "gb2": jax.random.uniform(ks[3], (1, d_out), jnp.float32, -scale2, scale2),
        "fw1": jax.random.uniform(ks[4], (d_in, hidden), jnp.float32, -scale1, scale1),
        "fb1": jax.random.uniform(ks[5], (1, hidden), jnp.float32, -scale1, scale1),
        "fw2": jax.random.uniform(ks[6], (hidden, d_out), jnp.float32, -scale2, scale2),
        "fb2": jax.random.uniform(ks[7], (1, d_out), jnp.float32, -scale2, scale2),
    }


if __name__ == "__main__":
    key = jax.random.PRNGKey(0)
    k_x1, k_x2, k_p = jax.random.split(key, 3)

    D_IN, HIDDEN, D_OUT = 32, 16, 32
    params = make_params(k_p, D_IN, HIDDEN, D_OUT)

    # Test 1: tiny graph, f32 matmuls, single tile (tight exactness check).
    x1 = jax.random.normal(k_x1, (8, D_IN), jnp.float32)
    out1 = jax.block_until_ready(
        attention_pooling(x1, params, matmul_dtype=jnp.float32))
    ref1 = _reference(x1, params)
    assert out1.shape == (D_OUT,)
    assert jnp.allclose(out1, ref1, atol=5e-3, rtol=5e-3), "f32 mismatch vs reference"

    # Test 2: ragged N (no wrapper padding), default bf16 matmuls, explicit
    # small tiles and a 2-way split of the node reduction (exercises the
    # boundary/phantom-tile masking and the parallel split axis).
    x2 = jax.random.normal(k_x2, (300, D_IN), jnp.float32)
    out2 = jax.block_until_ready(
        attention_pooling(x2, params, tile_n=64, num_splits=2))
    ref2 = _reference(x2, params)
    assert out2.shape == (D_OUT,)
    assert jnp.allclose(out2, ref2, atol=5e-2, rtol=5e-2), "bf16 mismatch vs reference"

    # Test 3: fully-default path (auto tile size / split count / bf16).
    out3 = jax.block_until_ready(attention_pooling(x2, params))
    assert jnp.allclose(out3, ref2, atol=5e-2, rtol=5e-2), "default-path mismatch"

    print("KERNEL_OK")
</pallas_src>

<mosaic_0001>
module attributes {stable_mosaic.version = 11 : i64} {
  func.func @_attn_pool_kernel(%arg0: i32, %arg1: i32, %arg2: memref<8x32xf32, #tpu.memory_space<vmem>>, %arg3: memref<32x32xf32, #tpu.memory_space<vmem>>, %arg4: memref<1x32xf32, #tpu.memory_space<vmem>>, %arg5: memref<32x256xf32, #tpu.memory_space<vmem>>, %arg6: memref<1x256xf32, #tpu.memory_space<vmem>>, %arg7: memref<1x1x32xf32, #tpu.memory_space<vmem>>, %arg8: memref<1x32xf32, #tpu.memory_space<vmem>>) attributes {dimension_semantics = [#tpu.dimension_semantics<parallel>, #tpu.dimension_semantics<arbitrary>], iteration_bounds = array<i64: 1, 1>, scalar_prefetch = 0 : i64, scratch_operands = 1 : i64, tpu.core_type = #tpu.core_type<tc>, window_params = [{transform_indices = @transform_0, window_bounds = array<i64: 8, 32>}, {pipeline_mode = #tpu.pipeline_mode<synchronous>, transform_indices = @transform_1, window_bounds = array<i64: 32, 32>}, {pipeline_mode = #tpu.pipeline_mode<synchronous>, transform_indices = @transform_2, window_bounds = array<i64: 1, 32>}, {pipeline_mode = #tpu.pipeline_mode<synchronous>, transform_indices = @transform_3, window_bounds = array<i64: 32, 256>}, {pipeline_mode = #tpu.pipeline_mode<synchronous>, transform_indices = @transform_4, window_bounds = array<i64: 1, 256>}, {transform_indices = @transform_5, window_bounds = array<i64: 1, 1, 32>}]} {
    %c0_i32 = arith.constant 0 : i32
    %0 = arith.cmpi eq, %arg1, %c0_i32 : i32
    %1 = arith.extui %0 : i1 to i32
    %c0_i32_0 = arith.constant 0 : i32
    %2 = arith.cmpi ne, %1, %c0_i32_0 : i32
    scf.if %2 {
      %cst_18 = arith.constant 0.000000e+00 : f32
      %31 = vector.broadcast %cst_18 : f32 to vector<1x32xf32>
      %c0_19 = arith.constant 0 : index
      %c0_20 = arith.constant 0 : index
      %32 = vector.load %arg8[%c0_19, %c0_20] : memref<1x32xf32, #tpu.memory_space<vmem>>, vector<1x32xf32>
      tpu.vector_store %arg8[%c0_19, %c0_20], %31 {strides = array<i32>} : memref<1x32xf32, #tpu.memory_space<vmem>>, vector<1x32xf32>,
    } else {
    }
    %c0 = arith.constant 0 : index
    %c0_1 = arith.constant 0 : index
    %3 = vector.load %arg2[%c0, %c0_1] : memref<8x32xf32, #tpu.memory_space<vmem>>, vector<8x32xf32>
    %c0_2 = arith.constant 0 : index
    %c0_3 = arith.constant 0 : index
    %4 = vector.load %arg3[%c0_2, %c0_3] : memref<32x32xf32, #tpu.memory_space<vmem>>, vector<32x32xf32>
    %cst = arith.constant dense<0.000000e+00> : vector<8x32xf32>
    %5 = tpu.matmul %3, %4, %cst {dimension_numbers = #tpu.dot_dimension_numbers<[1], [0], [0], [1], [0, 0, 1, 1], [], []>} : vector<8x32xf32>, vector<32x32xf32>, vector<8x32xf32> -> vector<8x32xf32>
    %c0_4 = arith.constant 0 : index
    %c0_5 = arith.constant 0 : index
    %6 = vector.load %arg4[%c0_4, %c0_5] : memref<1x32xf32, #tpu.memory_space<vmem>>, vector<1x32xf32>
    %7 = vector.broadcast %6 : vector<1x32xf32> to vector<8x32xf32>
    %8 = arith.addf %5, %7 : vector<8x32xf32>
    %cst_6 = arith.constant 0.000000e+00 : f32
    %9 = vector.broadcast %cst_6 : f32 to vector<8x32xf32>
    %10 = arith.maximumf %8, %9 : vector<8x32xf32>
    %c0_7 = arith.constant 0 : index
    %c0_8 = arith.constant 0 : index
    %11 = vector.load %arg5[%c0_7, %c0_8] : memref<32x256xf32, #tpu.memory_space<vmem>>, vector<32x256xf32>
    %cst_9 = arith.constant dense<0.000000e+00> : vector<8x256xf32>
    %12 = tpu.matmul %10, %11, %cst_9 {dimension_numbers = #tpu.dot_dimension_numbers<[1], [0], [0], [1], [0, 0, 1, 1], [], []>} : vector<8x32xf32>, vector<32x256xf32>, vector<8x256xf32> -> vector<8x256xf32>
    %c0_10 = arith.constant 0 : index
    %c0_11 = arith.constant 0 : index
    %13 = vector.load %arg6[%c0_10, %c0_11] : memref<1x256xf32, #tpu.memory_space<vmem>>, vector<1x256xf32>
    %14 = vector.broadcast %13 : vector<1x256xf32> to vector<8x256xf32>
    %15 = arith.addf %12, %14 : vector<8x256xf32>
    %16 = vector.extract_strided_slice %15 {offsets = [0, 0], sizes = [8, 32], strides = [1, 1]} : vector<8x256xf32> to vector<8x32xf32>
    %17 = vector.extract_strided_slice %15 {offsets = [0, 128], sizes = [8, 32], strides = [1, 1]} : vector<8x256xf32> to vector<8x32xf32>
    %c1_i32 = arith.constant 1 : i32
    %18 = arith.muli %arg0, %c1_i32 : i32
    %19 = arith.addi %18, %arg1 : i32
    %c8_i32 = arith.constant 8 : i32
    %20 = arith.muli %19, %c8_i32 : i32
    %c8_i32_12 = arith.constant 8 : i32
    %21 = arith.addi %20, %c8_i32_12 : i32
    %c8_i32_13 = arith.constant 8 : i32
    %22 = arith.cmpi sle, %21, %c8_i32_13 : i32
    %23 = arith.extui %22 : i1 to i32
    %c0_i32_14 = arith.constant 0 : i32
    %24 = arith.cmpi ne, %23, %c0_i32_14 : i32
    scf.if %24 {
      %cst_18 = arith.constant dense<0xFF800000> : vector<8xf32>
      %31 = vector.multi_reduction <maximumf>, %16, %cst_18 [1] : vector<8x32xf32> to vector<8xf32>
      %32 = vector.shape_cast %31 : vector<8xf32> to vector<8x1xf32>
      %33 = vector.broadcast %32 : vector<8x1xf32> to vector<8x32xf32>
      %34 = arith.subf %16, %33 : vector<8x32xf32>
      %35 = math.exp %34 : vector<8x32xf32>
      %cst_19 = arith.constant dense<0.000000e+00> : vector<8xf32>
      %36 = vector.multi_reduction <add>, %35, %cst_19 [1] : vector<8x32xf32> to vector<8xf32>
      %37 = vector.shape_cast %36 : vector<8xf32> to vector<8x1xf32>
      %38 = tpu.reciprocal %37 {approx = true} : vector<8x1xf32> -> vector<8x1xf32>
      %39 = vector.broadcast %38 : vector<8x1xf32> to vector<8x32xf32>
      %40 = arith.mulf %35, %39 : vector<8x32xf32>
      %41 = arith.mulf %17, %40 : vector<8x32xf32>
      %c0_20 = arith.constant 0 : index
      %c0_21 = arith.constant 0 : index
      %42 = vector.load %arg8[%c0_20, %c0_21] : memref<1x32xf32, #tpu.memory_space<vmem>>, vector<1x32xf32>
      %cst_22 = arith.constant dense<0.000000e+00> : vector<32xf32>
      %43 = vector.multi_reduction <add>, %41, %cst_22 [0] : vector<8x32xf32> to vector<32xf32>
      %44 = vector.shape_cast %43 : vector<32xf32> to vector<1x32xf32>
      %45 = arith.addf %42, %44 : vector<1x32xf32>
      %c0_23 = arith.constant 0 : index
      %c0_24 = arith.constant 0 : index
      %46 = vector.load %arg8[%c0_23, %c0_24] : memref<1x32xf32, #tpu.memory_space<vmem>>, vector<1x32xf32>
      tpu.vector_store %arg8[%c0_23, %c0_24], %45 {strides = array<i32>} : memref<1x32xf32, #tpu.memory_space<vmem>>, vector<1x32xf32>,
    } else {
    }
    %true = arith.constant true
    %25 = arith.xori %22, %true : i1
    %26 = arith.extui %25 : i1 to i32
    %c0_i32_15 = arith.constant 0 : i32
    %27 = arith.cmpi ne, %26, %c0_i32_15 : i32
    scf.if %27 {
      %31 = tpu.iota {dimensions = array<i32: 0>} : vector<8x32xi32>
      %32 = vector.broadcast %20 : i32 to vector<8x32xi32>
      %33 = arith.addi %32, %31 : vector<8x32xi32>
      %c8_i32_18 = arith.constant 8 : i32
      %34 = vector.broadcast %c8_i32_18 : i32 to vector<8x32xi32>
      %35 = arith.cmpi slt, %33, %34 : vector<8x32xi32>
      %cst_19 = arith.constant -1.000000e+30 : f32
      %36 = vector.broadcast %cst_19 : f32 to vector<8x32xf32>
      %37 = arith.select %35, %16, %36 : vector<8x32xi1>, vector<8x32xf32>
      %cst_20 = arith.constant 0.000000e+00 : f32
      %38 = vector.broadcast %cst_20 : f32 to vector<8x32xf32>
      %39 = arith.select %35, %17, %38 : vector<8x32xi1>, vector<8x32xf32>
      %cst_21 = arith.constant dense<0xFF800000> : vector<8xf32>
      %40 = vector.multi_reduction <maximumf>, %37, %cst_21 [1] : vector<8x32xf32> to vector<8xf32>
      %41 = vector.shape_cast %40 : vector<8xf32> to vector<8x1xf32>
      %42 = vector.broadcast %41 : vector<8x1xf32> to vector<8x32xf32>
      %43 = arith.subf %37, %42 : vector<8x32xf32>
      %44 = math.exp %43 : vector<8x32xf32>
      %cst_22 = arith.constant dense<0.000000e+00> : vector<8xf32>
      %45 = vector.multi_reduction <add>, %44, %cst_22 [1] : vector<8x32xf32> to vector<8xf32>
      %46 = vector.shape_cast %45 : vector<8xf32> to vector<8x1xf32>
      %47 = tpu.reciprocal %46 {approx = true} : vector<8x1xf32> -> vector<8x1xf32>
      %48 = vector.broadcast %47 : vector<8x1xf32> to vector<8x32xf32>
      %49 = arith.mulf %44, %48 : vector<8x32xf32>
      %50 = arith.mulf %39, %49 : vector<8x32xf32>
      %c0_23 = arith.constant 0 : index
      %c0_24 = arith.constant 0 : index
      %51 = vector.load %arg8[%c0_23, %c0_24] : memref<1x32xf32, #tpu.memory_space<vmem>>, vector<1x32xf32>
      %cst_25 = arith.constant dense<0.000000e+00> : vector<32xf32>
      %52 = vector.multi_reduction <add>, %50, %cst_25 [0] : vector<8x32xf32> to vector<32xf32>
      %53 = vector.shape_cast %52 : vector<32xf32> to vector<1x32xf32>
      %54 = arith.addf %51, %53 : vector<1x32xf32>
      %c0_26 = arith.constant 0 : index
      %c0_27 = arith.constant 0 : index
      %55 = vector.load %arg8[%c0_26, %c0_27] : memref<1x32xf32, #tpu.memory_space<vmem>>, vector<1x32xf32>
      tpu.vector_store %arg8[%c0_26, %c0_27], %54 {strides = array<i32>} : memref<1x32xf32, #tpu.memory_space<vmem>>, vector<1x32xf32>,
    } else {
    }
    %c0_i32_16 = arith.constant 0 : i32
    %28 = arith.cmpi eq, %arg1, %c0_i32_16 : i32
    %29 = arith.extui %28 : i1 to i32
    %c0_i32_17 = arith.constant 0 : i32
    %30 = arith.cmpi ne, %29, %c0_i32_17 : i32
    scf.if %30 {
      %c0_18 = arith.constant 0 : index
      %c0_19 = arith.constant 0 : index
      %31 = vector.load %arg8[%c0_18, %c0_19] : memref<1x32xf32, #tpu.memory_space<vmem>>, vector<1x32xf32>
      %c0_20 = arith.constant 0 : index
      %c0_21 = arith.constant 0 : index
      %c0_22 = arith.constant 0 : index
      %32 = vector.load %arg7[%c0_20, %c0_21, %c0_22] : memref<1x1x32xf32, #tpu.memory_space<vmem>>, vector<1x1x32xf32>
      %33 = vector.shape_cast %32 : vector<1x1x32xf32> to vector<1x32xf32>
      %34 = vector.shape_cast %31 : vector<1x32xf32> to vector<1x1x32xf32>
      tpu.vector_store %arg7[%c0_20, %c0_21, %c0_22], %34 {strides = array<i32>} : memref<1x1x32xf32, #tpu.memory_space<vmem>>, vector<1x1x32xf32>,
    } else {
    }
    return
  }
  func.func @transform_0(%arg0: i32, %arg1: i32) -> (i32, i32) {
    %c1_i32 = arith.constant 1 : i32
    %0 = arith.muli %arg0, %c1_i32 : i32
    %1 = arith.addi %0, %arg1 : i32
    %c0_i32 = arith.constant 0 : i32
    %2 = arith.minsi %1, %c0_i32 : i32
    %c0_i32_0 = arith.constant 0 : i32
    %c0_i32_1 = arith.constant 0 : i32
    return %2, %c0_i32_0 : i32, i32
  }
  func.func @transform_1(%arg0: i32, %arg1: i32) -> (i32, i32) {
    %c0_i32 = arith.constant 0 : i32
    %c0_i32_0 = arith.constant 0 : i32
    %c0_i32_1 = arith.constant 0 : i32
    return %c0_i32, %c0_i32_0 : i32, i32
  }
  func.func @transform_2(%arg0: i32, %arg1: i32) -> (i32, i32) {
    %c0_i32 = arith.constant 0 : i32
    %c0_i32_0 = arith.constant 0 : i32
    %c0_i32_1 = arith.constant 0 : i32
    return %c0_i32, %c0_i32_0 : i32, i32
  }
  func.func @transform_3(%arg0: i32, %arg1: i32) -> (i32, i32) {
    %c0_i32 = arith.constant 0 : i32
    %c0_i32_0 = arith.constant 0 : i32
    %c0_i32_1 = arith.constant 0 : i32
    return %c0_i32, %c0_i32_0 : i32, i32
  }
  func.func @transform_4(%arg0: i32, %arg1: i32) -> (i32, i32) {
    %c0_i32 = arith.constant 0 : i32
    %c0_i32_0 = arith.constant 0 : i32
    %c0_i32_1 = arith.constant 0 : i32
    return %c0_i32, %c0_i32_0 : i32, i32
  }
  func.func @transform_5(%arg0: i32, %arg1: i32) -> (i32, i32, i32) {
    %c0_i32 = arith.constant 0 : i32
    %c0_i32_0 = arith.constant 0 : i32
    %c0_i32_1 = arith.constant 0 : i32
    return %arg0, %c0_i32, %c0_i32_0 : i32, i32, i32
  }
}

</mosaic_0001>

<llo_original>
// kernel: tpu_custom_call.1
$region0: #{tpu_custom_call.1}
  #allocation0 [shape = 'u32[]', space=smem, size = 0x4, offset = 0x4, fixed_abs, tag = 'smem constant byte address 0x4 - core index']
  #allocation1 [shape = 'u32[144,128]{1,0:T(1,128)}', space=vmem, size = 0x12000, scoped, tag = 'internal scratch']
  #allocation2 [shape = 'f32[1,32]{1,0:T(1,128)}', space=vmem, size = 0x200, scoped, tag = 'scratch operand']
  %s0 = inlined_call_operand.hbm [shape: f32[8,32], index: 0, kind: input, shape index: {}]
  %s1 = inlined_call_operand.hbm [shape: f32[32,32], index: 1, kind: input, shape index: {}]
  %s2 = inlined_call_operand.vmem [shape: f32[1,32], index: 2, kind: input, shape index: {}]
  %s3 = inlined_call_operand.hbm [shape: f32[32,256], index: 3, kind: input, shape index: {}]
  %s4 = inlined_call_operand.vmem [shape: f32[1,256], index: 4, kind: input, shape index: {}]
  %s5 = inlined_call_operand.hbm [shape: f32[1,1,32], index: 5, kind: output, shape index: {}]
  %s6 = sld [smem:[#allocation0]]
  $region58: #{tpu_custom_call.1} parent=0
    _
  %s8 = ssub.s32 1, %s6
  %s9 = scalar_select 0, %s8, %s6
  $region1: #{tpu_custom_call.1} parent=0
    #allocation3 [shape = 'u8[4096]{0}', space=vmem, size = 0x1000, scoped, tag = 'input window, operand 0, single buffered']
    #allocation4 [shape = 's32[1]{0}', space=sflag, size = 0x4, scoped, tag = 'scoped memory for tpu_custom_call.1']
    #allocation5 [shape = 's32[1]{0}', space=sflag, size = 0x4, scoped, tag = 'scoped memory for tpu_custom_call.1']
    #allocation6 [shape = 'u8[16384]{0}', space=vmem, size = 0x4000, scoped, tag = 'input window, operand 1, single buffered']
    #allocation7 [shape = 's32[1]{0}', space=sflag, size = 0x4, scoped, tag = 'scoped memory for tpu_custom_call.1']
    #allocation8 [shape = 'u8[32768]{0}', space=vmem, size = 0x8000, scoped, tag = 'input window, operand 3, single buffered']
    #allocation9 [shape = 'u8[512]{0}', space=vmem, size = 0x400, scoped, tag = 'output window, operand 0, single buffered']
    %10 = vsyncpa [#allocation4], 0
    %11 = vsyncpa [#allocation7], 0
    %12 = vsyncpa [#allocation5], 0
    // Predicated region
    $region2: #{tpu_custom_call.1} parent=1 // pred_check
      _
    $region3: #{tpu_custom_call.1} parent=1 // pred_check_branch
      %14 = sbr.rel (0) target = $region5
    $region4: #{tpu_custom_call.1} parent=1 // pred_region
      %s15 = sadd.s32 0, 0
      %p16 = scmp.lt.s32.totalorder %s15, 0
      %s17 = scalar_select %p16, %s15, 0
      %s19 = ssub.s32 128, 128
      %20 = vsyncadd [#allocation4], %s19
      %s21 = smul.addr %s17, 128
      %s22 = scalar_lea.hbm %s0, %s21
      %s24 = sshll.u32 [#allocation3], 4
      %s25 = int_to_ptr.vmem [resolvable:$true] %s24
      %27 = dma.hbm_to_vmem [thread:$0]  %s22, 128, %s25, [#allocation4]
    $region5: #{tpu_custom_call.1} parent=1 // pred_fallthru
      _
    // Predicated region
    $region6: #{tpu_custom_call.1} parent=1 // pred_check
      _
    $region7: #{tpu_custom_call.1} parent=1 // pred_check_branch
      %29 = sbr.rel (0) target = $region9
    $region8: #{tpu_custom_call.1} parent=1 // pred_region
      %s31 = ssub.s32 512, 512
      %32 = vsyncadd [#allocation7], %s31
      %s33 = sshll.u32 [#allocation6], 4
      %s34 = int_to_ptr.vmem [resolvable:$true] %s33
      %39 = dma.hbm_to_vmem [thread:$0]  %s1, 512, %s34, [#allocation7], 128, 128, 8
    $region9: #{tpu_custom_call.1} parent=1 // pred_fallthru
      _
    // Predicated region
    $region10: #{tpu_custom_call.1} parent=1 // pred_check
      _
    $region11: #{tpu_custom_call.1} parent=1 // pred_check_branch
      %41 = sbr.rel (0) target = $region13
    $region12: #{tpu_custom_call.1} parent=1 // pred_region
      _
    $region13: #{tpu_custom_call.1} parent=1 // pred_fallthru
      _
    // Predicated region
    $region14: #{tpu_custom_call.1} parent=1 // pred_check
      _
    $region15: #{tpu_custom_call.1} parent=1 // pred_check_branch
      %43 = sbr.rel (0) target = $region17
    $region16: #{tpu_custom_call.1} parent=1 // pred_region
      %s45 = ssub.s32 1024, 1024
      %46 = vsyncadd [#allocation7], %s45
      %s47 = sshll.u32 [#allocation8], 4
      %s48 = int_to_ptr.vmem [resolvable:$true] %s47
      %53 = dma.hbm_to_vmem [thread:$0]  %s3, 1024, %s48, [#allocation7], 256, 256, 16
    $region17: #{tpu_custom_call.1} parent=1 // pred_fallthru
      _
    // Predicated region
    $region18: #{tpu_custom_call.1} parent=1 // pred_check
      _
    $region19: #{tpu_custom_call.1} parent=1 // pred_check_branch
      %55 = sbr.rel (0) target = $region21
    $region20: #{tpu_custom_call.1} parent=1 // pred_region
      _
    $region21: #{tpu_custom_call.1} parent=1 // pred_fallthru
      _
    // Predicated region
    $region22: #{tpu_custom_call.1} parent=1 // pred_check
      _
    $region23: #{tpu_custom_call.1} parent=1 // pred_check_branch
      %57 = sbr.rel (0) target = $region25
    $region24: #{tpu_custom_call.1} parent=1 // pred_region
      %58 = dma.done [#allocation4], 128
    $region25: #{tpu_custom_call.1} parent=1 // pred_fallthru
      _
    // Predicated region
    $region26: #{tpu_custom_call.1} parent=1 // pred_check
      _
    $region27: #{tpu_custom_call.1} parent=1 // pred_check_branch
      %60 = sbr.rel (0) target = $region29
    $region28: #{tpu_custom_call.1} parent=1 // pred_region
      %61 = dma.done [#allocation7], 512
    $region29: #{tpu_custom_call.1} parent=1 // pred_fallthru
      _
    // Predicated region
    $region30: #{tpu_custom_call.1} parent=1 // pred_check
      _
    $region31: #{tpu_custom_call.1} parent=1 // pred_check_branch
      %63 = sbr.rel (0) target = $region33
    $region32: #{tpu_custom_call.1} parent=1 // pred_region
      %64 = dma.done [#allocation7], 1024
    $region33: #{tpu_custom_call.1} parent=1 // pred_fallthru
      _
    %s65 = sadd.s32 0, 0
    %p66 = scmp.lt.s32.totalorder %s65, 0
    %s67 = scalar_select %p66, %s65, 0
    %p68 = scmp.eq.s32.totalorder 0, 0
    // Predicated region
    $region34: #{tpu_custom_call.1} parent=1 // pred_check
      %p69 = pneg %p68
    $region35: #{tpu_custom_call.1} parent=1 // pred_check_branch
      %71 = sbr.rel (%p69) target = $region37
    $region36: #{tpu_custom_call.1} parent=1 // pred_region
      %vm72 = vcmask 253952
      %73 = vst.msk [vmem:[#allocation2] sm:$0x1] %vm72, 0.0
    $region37: #{tpu_custom_call.1} parent=1 // pred_fallthru
      _
    %v74 = vld [vmem:[#allocation3] sm:$0xff]
    %v75 = vld [vmem:[#allocation6] sm:$0xff]
    %v76 = vld [vmem:[#allocation6 + $0x8] sm:$0xff]
    %v77 = vld [vmem:[#allocation6 + $0x10] sm:$0xff]
    %v78 = vld [vmem:[#allocation6 + $0x18] sm:$0xff]
    %v79 = vld [vmem:[%s2] sm:$0x1]
    %v81 = vlaneseq
    %v82 = vshrl.u32 %v81, 7
    %v83 = vsub.s32 0, %v82
    %v84 = vrot.slane %v79, %v83
    %vm86 = vcmask 261120
    %v88 = vsel %vm86, %v74, 0
    %90 = vmatprep.subr.mxu0 0.0
    %91 = vmatpush1.msra.mxu0 %v75
    %92 = vmatprep.subr.mxu0 0.0
    %93 = vmatpush1.msra.mxu0 %v76
    %94 = vmatprep.subr.mxu0 0.0
    %95 = vmatpush1.msra.mxu0 %v77
    %96 = vmatprep.subr.mxu0 0.0
    %97 = vmatpush1.msra.mxu0 %v78
    %98 = vmatprep.subr.mxu0 0.0
    %99 = vmatpush1.msra.mxu0 0.0
    %100 = vmatprep.subr.mxu0 0.0
    %101 = vmatpush1.msra.mxu0 0.0
    %102 = vmatprep.subr.mxu0 0.0
    %103 = vmatpush1.msra.mxu0 0.0
    %104 = vmatprep.subr.mxu0 0.0
    %105 = vmatpush1.msra.mxu0 0.0
    %106 = vmatprep.subr.mxu0 0.0
    %107 = vmatpush1.msra.mxu0 0.0
    %108 = vmatprep.subr.mxu0 0.0
    %109 = vmatpush1.msra.mxu0 0.0
    %110 = vmatprep.subr.mxu0 0.0
    %111 = vmatpush1.msra.mxu0 0.0
    %112 = vmatprep.subr.mxu0 0.0
    %113 = vmatpush1.msra.mxu0 0.0
    %114 = vmatprep.subr.mxu0 0.0
    %115 = vmatpush1.msra.mxu0 0.0
    %116 = vmatprep.subr.mxu0 0.0
    %117 = vmatpush1.msra.mxu0 0.0
    %118 = vmatprep.subr.mxu0 0.0
    %119 = vmatpush1.msra.mxu0 0.0
    %120 = vmatprep.subr.mxu0 0.0
    %121 = vmatpush1.msra.mxu0 0.0
    %122 = vmatprep.subr.mxu0 0.0
    %123 = vmatpush1.msra.mxu0 0.0
    %124 = vmatprep.subr.mxu0 0.0
    %125 = vmatpush1.msra.mxu0 0.0
    %126 = vmatprep.subr.mxu0 0.0
    %127 = vmatpush1.msra.mxu0 0.0
    %128 = vmatprep.subr.mxu0 0.0
    %129 = vmatpush1.msra.mxu0 0.0
    %130 = vmatprep.subr.mxu0 0.0
    %131 = vmatpush1.msra.mxu0 0.0
    %132 = vmatprep.subr.mxu0 0.0
    %133 = vmatpush1.msra.mxu0 0.0
    %134 = vmatprep.subr.mxu0 0.0
    %135 = vmatpush1.msra.mxu0 0.0
    %136 = vmatprep.subr.mxu0 0.0
    %137 = vmatpush1.msra.mxu0 0.0
    %138 = vmatprep.subr.mxu0 0.0
    %139 = vmatpush1.msra.mxu0 0.0
    %140 = vmatprep.subr.mxu0 0.0
    %141 = vmatpush1.msra.mxu0 0.0
    %142 = vmatprep.subr.mxu0 0.0
    %143 = vmatpush1.msra.mxu0 0.0
    %144 = vmatprep.subr.mxu0 0.0
    %145 = vmatpush1.msra.mxu0 0.0
    %146 = vmatprep.subr.mxu0 0.0
    %147 = vmatpush1.msra.mxu0 0.0
    %148 = vmatprep.subr.mxu0 0.0
    %149 = vmatpush1.msra.mxu0 0.0
    %150 = vmatprep.subr.mxu0 0.0
    %151 = vmatpush1.msra.mxu0 0.0
    %152 = vmatprep.subr.mxu0 0.0
    %153 = vmatpush1.msra.mxu0 0.0
    %154 = vmatprep.mubr.f32.mxu0 0.0
    %155 = vmatmul.mubr.f32.gmra.mrb[0].mxu0 %v88
    %v156 = vpop.f32.mrb[0].mxu0
    %v157 = vadd.f32 %v84, %v156
    %v158 = vpop.f32.mrb[0].mxu0
    %159 = vdwg.mxu0
    %v160 = vmax.f32 %v157, 0.0
    %v161 = vld [vmem:[#allocation8] sm:$0xff]
    %v162 = vld [vmem:[#allocation8 + $0x8] sm:$0xff]
    %v163 = vld [vmem:[#allocation8 + $0x10] sm:$0xff]
    %v164 = vld [vmem:[#allocation8 + $0x18] sm:$0xff]
    %v165 = vld [vmem:[#allocation8 + $0x20] sm:$0xff]
    %v166 = vld [vmem:[#allocation8 + $0x28] sm:$0xff]
    %v167 = vld [vmem:[#allocation8 + $0x30] sm:$0xff]
    %v168 = vld [vmem:[#allocation8 + $0x38] sm:$0xff]
    %v169 = vld [vmem:[%s4] sm:$0x3]
    %v171 = vlaneseq
    %v172 = vshrl.u32 %v171, 7
    %v173 = vsub.s32 0, %v172
    %v174 = vrot.slane %v169, %v173
    %v175 = vlaneseq
    %v176 = vshrl.u32 %v175, 7
    %v177 = vsub.s32 1, %v176
    %v178 = vrot.slane %v169, %v177
    %v182 = vsel %vm86, %v160, 0
    %184 = vmatprep.subr.mxu0 %v162
    %185 = vmatpush1.msra.mxu0 %v161
    %186 = vmatprep.subr.mxu0 %v164
    %187 = vmatpush1.msra.mxu0 %v163
    %188 = vmatprep.subr.mxu0 %v166
    %189 = vmatpush1.msra.mxu0 %v165
    %190 = vmatprep.subr.mxu0 %v168
    %191 = vmatpush1.msra.mxu0 %v167
    %192 = vmatprep.subr.mxu0 0.0
    %193 = vmatpush1.msra.mxu0 0.0
    %194 = vmatprep.subr.mxu0 0.0
    %195 = vmatpush1.msra.mxu0 0.0
    %196 = vmatprep.subr.mxu0 0.0
    %197 = vmatpush1.msra.mxu0 0.0
    %198 = vmatprep.subr.mxu0 0.0
    %199 = vmatpush1.msra.mxu0 0.0
    %200 = vmatprep.subr.mxu0 0.0
    %201 = vmatpush1.msra.mxu0 0.0
    %202 = vmatprep.subr.mxu0 0.0
    %203 = vmatpush1.msra.mxu0 0.0
    %204 = vmatprep.subr.mxu0 0.0
    %205 = vmatpush1.msra.mxu0 0.0
    %206 = vmatprep.subr.mxu0 0.0
    %207 = vmatpush1.msra.mxu0 0.0
    %208 = vmatprep.subr.mxu0 0.0
    %209 = vmatpush1.msra.mxu0 0.0
    %210 = vmatprep.subr.mxu0 0.0
    %211 = vmatpush1.msra.mxu0 0.0
    %212 = vmatprep.subr.mxu0 0.0
    %213 = vmatpush1.msra.mxu0 0.0
    %214 = vmatprep.subr.mxu0 0.0
    %215 = vmatpush1.msra.mxu0 0.0
    %216 = vmatprep.subr.mxu0 0.0
    %217 = vmatpush1.msra.mxu0 0.0
    %218 = vmatprep.subr.mxu0 0.0
    %219 = vmatpush1.msra.mxu0 0.0
    %220 = vmatprep.subr.mxu0 0.0
    %221 = vmatpush1.msra.mxu0 0.0
    %222 = vmatprep.subr.mxu0 0.0
    %223 = vmatpush1.msra.mxu0 0.0
    %224 = vmatprep.subr.mxu0 0.0
    %225 = vmatpush1.msra.mxu0 0.0
    %226 = vmatprep.subr.mxu0 0.0
    %227 = vmatpush1.msra.mxu0 0.0
    %228 = vmatprep.subr.mxu0 0.0
    %229 = vmatpush1.msra.mxu0 0.0
    %230 = vmatprep.subr.mxu0 0.0
    %231 = vmatpush1.msra.mxu0 0.0
    %232 = vmatprep.subr.mxu0 0.0
    %233 = vmatpush1.msra.mxu0 0.0
    %234 = vmatprep.subr.mxu0 0.0
    %235 = vmatpush1.msra.mxu0 0.0
    %236 = vmatprep.subr.mxu0 0.0
    %237 = vmatpush1.msra.mxu0 0.0
    %238 = vmatprep.subr.mxu0 0.0
    %239 = vmatpush1.msra.mxu0 0.0
    %240 = vmatprep.subr.mxu0 0.0
    %241 = vmatpush1.msra.mxu0 0.0
    %242 = vmatprep.subr.mxu0 0.0
    %243 = vmatpush1.msra.mxu0 0.0
    %244 = vmatprep.subr.mxu0 0.0
    %245 = vmatpush1.msra.mxu0 0.0
    %246 = vmatprep.subr.mxu0 0.0
    %247 = vmatpush1.msra.mxu0 0.0
    %248 = vmatprep.mubr.f32.mxu0 0.0
    %249 = vmatmul.mubr.f32.gmra.mrb[0].mxu0 %v182
    %v250 = vpop.f32.mrb[0].mxu0
    %v251 = vadd.f32 %v174, %v250
    %v252 = vpop.f32.mrb[0].mxu0
    %v253 = vadd.f32 %v178, %v252
    %254 = vdwg.mxu0
    %s255 = sadd.s32 0, 0
    %s256 = smul.u32 %s255, 8
    %s257 = sadd.s32 %s256, 8
    %p258 = scmp.le.s32.totalorder %s257, 8
    // Predicated region
    $region38: #{tpu_custom_call.1} parent=1 // pred_check
      %p259 = pneg %p258
    $region39: #{tpu_custom_call.1} parent=1 // pred_check_branch
      %261 = sbr.rel (%p259) target = $region41
    $region40: #{tpu_custom_call.1} parent=1 // pred_region
      %v262 = vsel %vm86, %v251, -inf
      %263 = vmax.xlane.f32.xlu0 %v262
      %v264 = vpop.xlane.xlu0 %263
      %v265 = vsub.f32 %v251, %v264
      %v266 = vmul.f32 %v265, 1.442695
      %v267 = vpow.pop %v266
      %v268 = vsel %vm86, %v267, 0.0
      %269 = vadd.xlane.f32.xlu0 %v268
      %v270 = vpop.xlane.xlu0 %269
      %v271 = vrcp.pop %v270
      %v272 = vmul.f32 %v267, %v271
      %v273 = vmul.f32 %v253, %v272
      %v274 = vld [vmem:[#allocation2] sm:$0x1]
      %v275 = vsel %vm86, %v273, 0.0
      %v276 = vrot.slane %v275, 4
      %v277 = vadd.f32 %v275, %v276
      %v278 = vrot.slane %v277, 2
      %v279 = vadd.f32 %v277, %v278
      %v280 = vrot.slane %v279, 1
      %v281 = vadd.f32 %v279, %v280
      %v282 = vadd.f32 %v274, %v281
      %vm283 = vcmask 253952
      %284 = vst.msk [vmem:[#allocation2] sm:$0x1] %vm283, %v282
    $region41: #{tpu_custom_call.1} parent=1 // pred_fallthru
      _
    %p285 = scmp.gt.s32.totalorder %s257, 8
    // Predicated region
    $region42: #{tpu_custom_call.1} parent=1 // pred_check
      %p286 = pneg %p285
    $region43: #{tpu_custom_call.1} parent=1 // pred_check_branch
      %288 = sbr.rel (%p286) target = $region45
    $region44: #{tpu_custom_call.1} parent=1 // pred_region
      %v289 = vlaneseq
      %v290 = vshrl.u32 %v289, 7
      %v291 = vstv %s256
      %v292 = vadd.s32 %v291, %v290
      %vm293 = vcmp.lt.s32.totalorder %v292, 8
      %v294 = vsel %vm293, %v251, -1e+30
      %v295 = vsel %vm293, %v253, 0.0
      %v296 = vsel %vm86, %v294, -inf
      %297 = vmax.xlane.f32.xlu0 %v296
      %v298 = vpop.xlane.xlu0 %297
      %v299 = vsub.f32 %v294, %v298
      %v300 = vmul.f32 %v299, 1.442695
      %v301 = vpow.pop %v300
      %v302 = vsel %vm86, %v301, 0.0
      %303 = vadd.xlane.f32.xlu0 %v302
      %v304 = vpop.xlane.xlu0 %303
      %v305 = vrcp.pop %v304
      %v306 = vmul.f32 %v301, %v305
      %v307 = vmul.f32 %v295, %v306
      %v308 = vld [vmem:[#allocation2] sm:$0x1]
      %v309 = vsel %vm86, %v307, 0.0
      %v310 = vrot.slane %v309, 4
      %v311 = vadd.f32 %v309, %v310
      %v312 = vrot.slane %v311, 2
      %v313 = vadd.f32 %v311, %v312
      %v314 = vrot.slane %v313, 1
      %v315 = vadd.f32 %v313, %v314
      %v316 = vadd.f32 %v308, %v315
      %vm317 = vcmask 253952
      %318 = vst.msk [vmem:[#allocation2] sm:$0x1] %vm317, %v316
    $region45: #{tpu_custom_call.1} parent=1 // pred_fallthru
      _
    // Predicated region
    $region46: #{tpu_custom_call.1} parent=1 // pred_check
      %p319 = pneg %p68
    $region47: #{tpu_custom_call.1} parent=1 // pred_check_branch
      %321 = sbr.rel (%p319) target = $region49
    $region48: #{tpu_custom_call.1} parent=1 // pred_region
      %v322 = vld [vmem:[#allocation2] sm:$0x1]
      %vm323 = vcmask 253952
      %324 = vst.msk [vmem:[#allocation9] sm:$0x1] %vm323, %v322
    $region49: #{tpu_custom_call.1} parent=1 // pred_fallthru
      _
    // Predicated region
    $region50: #{tpu_custom_call.1} parent=1 // pred_check
      _
    $region51: #{tpu_custom_call.1} parent=1 // pred_check_branch
      %326 = sbr.rel (0) target = $region53
    $region52: #{tpu_custom_call.1} parent=1 // pred_region
      %s328 = ssub.s32 16, 16
      %329 = vsyncadd [#allocation5], %s328
      %s331 = sshll.u32 [#allocation9], 4
      %s332 = int_to_ptr.vmem [resolvable:$true] %s331
      %334 = dma.vmem_to_hbm [thread:$0]  %s332, 16, %s5, [#allocation5]
    $region53: #{tpu_custom_call.1} parent=1 // pred_fallthru
      _
    // Predicated region
    $region54: #{tpu_custom_call.1} parent=1 // pred_check
      _
    $region55: #{tpu_custom_call.1} parent=1 // pred_check_branch
      %336 = sbr.rel (0) target = $region57
    $region56: #{tpu_custom_call.1} parent=1 // pred_region
      %337 = dma.done [#allocation5], 16
    $region57: #{tpu_custom_call.1} parent=1 // pred_fallthru
      _
    %338 = vsyncpa [#allocation4], 1
    %339 = vsyncpa [#allocation7], 1
    %340 = vsyncpa [#allocation5], 1

</llo_original>
